<compile_context>
chip_gen: v5e
topology: v5e:2x2
jax: 0.10.0
libtpu: 0.0.40
codegen_flags: <defaults>
</compile_context>

<pallas_src>
import numpy as np
import jax
import jax.numpy as jnp
from jax.experimental import pallas as pl
from jax.experimental.pallas import tpu as pltpu

WEIGHT_CE = 1.0
WEIGHT_DICE = 1.0
WEIGHT_CBDICE = 1.0
DICE_SMOOTH = 1e-5          # soft_dice_kwargs = {'batch_dice': True, 'smooth': 1e-5, 'do_bg': False}
NUM_CORE_SPLITS = 2         # leading "parallel" grid axis (megacore on v7x)


def _make_stats_kernel(num_classes: int, tile_v: int, total_v: int, tiles_per_core: int):
    """Kernel accumulating per-class sufficient statistics over lane-dense tiles."""

    def kernel(logits_ref, tgt_ref, tp_ref, ps_ref, gs_ref, nll_ref):
        # Resident per-core accumulators: zero them on this core's first step.
        @pl.when((pl.program_id(1) == 0) & (pl.program_id(2) == 0))
        def _init():
            tp_ref[...] = jnp.zeros_like(tp_ref)
            ps_ref[...] = jnp.zeros_like(ps_ref)
            gs_ref[...] = jnp.zeros_like(gs_ref)
            nll_ref[...] = jnp.zeros_like(nll_ref)

        # Global voxel-tile index for this (core, j) pair and ragged-edge mask.
        t = pl.program_id(0) * tiles_per_core + pl.program_id(2)
        start = t * tile_v
        lane = jax.lax.broadcasted_iota(jnp.int32, (1, tile_v), 1)
        mask = (lane + start) < total_v                       # (1, tile_v) bool
        maskf = mask.astype(jnp.float32)

        lg = jnp.where(mask, logits_ref[0], 0.0)              # (C, tile_v) f32, NaN-safe padding
        tgt = tgt_ref[0]                                      # (1, tile_v) i32
        cls = jax.lax.broadcasted_iota(jnp.int32, (num_classes, tile_v), 0)
        oh = jnp.where((cls == tgt) & mask, 1.0, 0.0)         # masked one-hot, (C, tile_v)

        # Softmax over classes (sublane axis); reciprocal-multiply, no (C,T) divide.
        mx = jnp.max(lg, axis=0, keepdims=True)               # (1, tile_v)
        e = jnp.exp(lg - mx)
        s = jnp.sum(e, axis=0, keepdims=True)
        p = e * (1.0 / s)
        lsem = jnp.log(s) + mx                                 # log-sum-exp per voxel

        # Sufficient statistics (lane reductions). fp/fn reconstructed in wrapper.
        tp_ref[0] += jnp.sum(p * oh, axis=1, keepdims=True)           # sum p on true class
        ps_ref[0] += jnp.sum(p * maskf, axis=1, keepdims=True)        # sum p per class
        gs_ref[0] += jnp.sum(oh, axis=1, keepdims=True)               # voxel count per class
        nll_ref[0] += jnp.sum(oh * (lsem - lg), axis=1, keepdims=True)  # -log softmax at target

    return kernel


def dc_and_ce_and_cbdc_loss(net_output, target, *, tile_v=8192,
                            weight_ce=WEIGHT_CE, weight_dice=WEIGHT_DICE,
                            weight_cbdice=WEIGHT_CBDICE, smooth=DICE_SMOOTH,
                            ignore_label=None):
    """net_output: (B, C, *spatial) float logits; target: (B, 1, *spatial) int labels."""
    assert ignore_label is None  # TODO(synk): ignore_label path not implemented.
    b, c = net_output.shape[:2]
    spatial = net_output.shape[2:]
    assert target.shape[0] == b and target.shape[1] == 1
    v = int(np.prod(spatial))
    n = b * v

    # Free reshapes on the native contiguous layout -- no transpose, no extra HBM pass.
    logits = net_output.reshape(b, c, v).astype(jnp.float32)
    tgt = target.reshape(b, 1, v).astype(jnp.int32)

    assert tile_v % 128 == 0
    tile_v = min(tile_v, ((v + 127) // 128) * 128)            # don't exceed the (padded) voxel extent
    nvt = -(-v // tile_v)                                     # number of voxel tiles
    tpc = -(-nvt // NUM_CORE_SPLITS)                          # tiles handled per core split

    def vox_map(core, bi, j):
        # Clamp to the last real tile; fully-out-of-range tiles are masked in-kernel.
        return (bi, 0, jnp.minimum(core * tpc + j, nvt - 1))

    stat_shape = jax.ShapeDtypeStruct((NUM_CORE_SPLITS, c, 1), jnp.float32)
    out_block = pl.BlockSpec((1, c, 1), lambda core, bi, j: (core, 0, 0))

    tp, ps, gs, nll = pl.pallas_call(
        _make_stats_kernel(c, tile_v, v, tpc),
        out_shape=(stat_shape, stat_shape, stat_shape, stat_shape),
        grid_spec=pltpu.PrefetchScalarGridSpec(
            num_scalar_prefetch=0,
            grid=(NUM_CORE_SPLITS, b, tpc),
            in_specs=[
                pl.BlockSpec((1, c, tile_v), vox_map),   # logits tile, classes on sublanes
                pl.BlockSpec((1, 1, tile_v), vox_map),   # labels tile, lane-dense
            ],
            out_specs=[out_block, out_block, out_block, out_block],
        ),
        compiler_params=pltpu.CompilerParams(
            dimension_semantics=("parallel", "arbitrary", "arbitrary")),
    )(logits, tgt)

    # Combine the per-core partial statistics (tiny, plain JAX).
    tp = jnp.sum(tp[:, :, 0], axis=0)
    ps = jnp.sum(ps[:, :, 0], axis=0)
    gs = jnp.sum(gs[:, :, 0], axis=0)
    nll = jnp.sum(nll[:, :, 0], axis=0)

    fp = ps - tp
    fn = gs - tp
    dc = (2.0 * tp + smooth) / jnp.clip(2.0 * tp + fp + fn + smooth, 1e-8)
    dc_loss = -jnp.mean(dc[1:])                 # batch_dice=True, do_bg=False
    ce_loss = jnp.sum(nll) / n                  # mean CE over all voxels

    # TODO(synk): weight_cbdice * SoftcbDiceLoss term omitted (skeletonization/EDT
    # has no Pallas equivalent).
    del weight_cbdice
    return weight_ce * ce_loss + weight_dice * dc_loss


def reference_loss(net_output, target, *, weight_ce=WEIGHT_CE, weight_dice=WEIGHT_DICE,
                   smooth=DICE_SMOOTH):
    """Pure-JAX reference mirroring the PyTorch CE + SoftDice terms."""
    b, c = net_output.shape[:2]
    v = int(np.prod(net_output.shape[2:]))
    n = b * v
    lg = jnp.moveaxis(net_output.reshape(b, c, v), 1, 2).reshape(n, c).astype(jnp.float32)
    t = target.reshape(n).astype(jnp.int32)
    oh = jax.nn.one_hot(t, c, dtype=jnp.float32)
    logp = jax.nn.log_softmax(lg, axis=-1)
    p = jnp.exp(logp)
    ce = -jnp.sum(oh * logp) / n
    tp = jnp.sum(p * oh, axis=0)
    fp = jnp.sum(p, axis=0) - tp
    fn = jnp.sum(oh, axis=0) - tp
    dc = (2.0 * tp + smooth) / jnp.clip(2.0 * tp + fp + fn + smooth, 1e-8)
    dice = -jnp.mean(dc[1:])
    return weight_ce * ce + weight_dice * dice


if __name__ == "__main__":
    key = jax.random.PRNGKey(0)
    k1, k2 = jax.random.split(key)
    # V = 16*15*17 = 4080 is NOT a multiple of the tile size -> exercises the
    # ragged-tile masking path as well as multi-tile accumulation and core split.
    B, C, X, Y, Z = 2, 24, 16, 15, 17
    net_output = jax.random.normal(k1, (B, C, X, Y, Z), dtype=jnp.float32)
    target = jax.random.randint(k2, (B, 1, X, Y, Z), 0, C, dtype=jnp.int32)

    loss = jax.block_until_ready(dc_and_ce_and_cbdc_loss(net_output, target, tile_v=1024))
    ref = jax.block_until_ready(reference_loss(net_output, target))
    np.testing.assert_allclose(np.asarray(loss), np.asarray(ref), rtol=1e-3, atol=1e-3)
    print("KERNEL_OK")
</pallas_src>

<mosaic_0001>
module attributes {stable_mosaic.version = 11 : i64} {
  func.func @kernel(%arg0: i32, %arg1: i32, %arg2: i32, %arg3: memref<1x24x1024xf32, #tpu.memory_space<vmem>>, %arg4: memref<1x1x1024xi32, #tpu.memory_space<vmem>>, %arg5: memref<1x24x1xf32, #tpu.memory_space<vmem>>, %arg6: memref<1x24x1xf32, #tpu.memory_space<vmem>>, %arg7: memref<1x24x1xf32, #tpu.memory_space<vmem>>, %arg8: memref<1x24x1xf32, #tpu.memory_space<vmem>>) attributes {dimension_semantics = [#tpu.dimension_semantics<parallel>, #tpu.dimension_semantics<arbitrary>, #tpu.dimension_semantics<arbitrary>], iteration_bounds = array<i64: 2, 2, 2>, scalar_prefetch = 0 : i64, scratch_operands = 0 : i64, tpu.core_type = #tpu.core_type<tc>, window_params = [{transform_indices = @transform_0, window_bounds = array<i64: 1, 24, 1024>}, {transform_indices = @transform_1, window_bounds = array<i64: 1, 1, 1024>}, {transform_indices = @transform_2, window_bounds = array<i64: 1, 24, 1>}, {transform_indices = @transform_3, window_bounds = array<i64: 1, 24, 1>}, {transform_indices = @transform_4, window_bounds = array<i64: 1, 24, 1>}, {transform_indices = @transform_5, window_bounds = array<i64: 1, 24, 1>}]} {
    %c0_i32 = arith.constant 0 : i32
    %0 = arith.cmpi eq, %arg1, %c0_i32 : i32
    %c0_i32_0 = arith.constant 0 : i32
    %1 = arith.cmpi eq, %arg2, %c0_i32_0 : i32
    %2 = arith.andi %0, %1 : i1
    %3 = arith.extui %2 : i1 to i32
    %c0_i32_1 = arith.constant 0 : i32
    %4 = arith.cmpi ne, %3, %c0_i32_1 : i32
    scf.if %4 {
      %cst_40 = arith.constant 0.000000e+00 : f32
      %82 = vector.broadcast %cst_40 : f32 to vector<1x24x1xf32>
      %c0_41 = arith.constant 0 : index
      %c0_42 = arith.constant 0 : index
      %c0_43 = arith.constant 0 : index
      %83 = vector.load %arg5[%c0_41, %c0_42, %c0_43] : memref<1x24x1xf32, #tpu.memory_space<vmem>>, vector<1x24x1xf32>
      tpu.vector_store %arg5[%c0_41, %c0_42, %c0_43], %82 {strides = array<i32>} : memref<1x24x1xf32, #tpu.memory_space<vmem>>, vector<1x24x1xf32>,
      %cst_44 = arith.constant 0.000000e+00 : f32
      %84 = vector.broadcast %cst_44 : f32 to vector<1x24x1xf32>
      %c0_45 = arith.constant 0 : index
      %c0_46 = arith.constant 0 : index
      %c0_47 = arith.constant 0 : index
      %85 = vector.load %arg6[%c0_45, %c0_46, %c0_47] : memref<1x24x1xf32, #tpu.memory_space<vmem>>, vector<1x24x1xf32>
      tpu.vector_store %arg6[%c0_45, %c0_46, %c0_47], %84 {strides = array<i32>} : memref<1x24x1xf32, #tpu.memory_space<vmem>>, vector<1x24x1xf32>,
      %cst_48 = arith.constant 0.000000e+00 : f32
      %86 = vector.broadcast %cst_48 : f32 to vector<1x24x1xf32>
      %c0_49 = arith.constant 0 : index
      %c0_50 = arith.constant 0 : index
      %c0_51 = arith.constant 0 : index
      %87 = vector.load %arg7[%c0_49, %c0_50, %c0_51] : memref<1x24x1xf32, #tpu.memory_space<vmem>>, vector<1x24x1xf32>
      tpu.vector_store %arg7[%c0_49, %c0_50, %c0_51], %86 {strides = array<i32>} : memref<1x24x1xf32, #tpu.memory_space<vmem>>, vector<1x24x1xf32>,
      %cst_52 = arith.constant 0.000000e+00 : f32
      %88 = vector.broadcast %cst_52 : f32 to vector<1x24x1xf32>
      %c0_53 = arith.constant 0 : index
      %c0_54 = arith.constant 0 : index
      %c0_55 = arith.constant 0 : index
      %89 = vector.load %arg8[%c0_53, %c0_54, %c0_55] : memref<1x24x1xf32, #tpu.memory_space<vmem>>, vector<1x24x1xf32>
      tpu.vector_store %arg8[%c0_53, %c0_54, %c0_55], %88 {strides = array<i32>} : memref<1x24x1xf32, #tpu.memory_space<vmem>>, vector<1x24x1xf32>,
    } else {
    }
    %c2_i32 = arith.constant 2 : i32
    %5 = arith.muli %arg0, %c2_i32 : i32
    %6 = arith.addi %5, %arg2 : i32
    %c1024_i32 = arith.constant 1024 : i32
    %7 = arith.muli %6, %c1024_i32 : i32
    %8 = tpu.iota {dimensions = array<i32: 1>} : vector<1x1024xi32>
    %9 = vector.broadcast %7 : i32 to vector<1x1024xi32>
    %10 = arith.addi %8, %9 : vector<1x1024xi32>
    %c4080_i32 = arith.constant 4080 : i32
    %11 = vector.broadcast %c4080_i32 : i32 to vector<1x1024xi32>
    %12 = arith.cmpi slt, %10, %11 : vector<1x1024xi32>
    %13 = arith.extui %12 : vector<1x1024xi1> to vector<1x1024xi32>
    %14 = arith.sitofp %13 : vector<1x1024xi32> to vector<1x1024xf32>
    %c0 = arith.constant 0 : index
    %c0_2 = arith.constant 0 : index
    %c0_3 = arith.constant 0 : index
    %15 = vector.load %arg3[%c0, %c0_2, %c0_3] : memref<1x24x1024xf32, #tpu.memory_space<vmem>>, vector<1x24x1024xf32>
    %16 = vector.shape_cast %15 : vector<1x24x1024xf32> to vector<24x1024xf32>
    %cst = arith.constant 0.000000e+00 : f32
    %17 = vector.shape_cast %12 : vector<1x1024xi1> to vector<1x1024xi1>
    %18 = vector.broadcast %17 : vector<1x1024xi1> to vector<24x1024xi1>
    %19 = vector.broadcast %cst : f32 to vector<24x1024xf32>
    %20 = arith.select %18, %16, %19 : vector<24x1024xi1>, vector<24x1024xf32>
    %c0_4 = arith.constant 0 : index
    %c0_5 = arith.constant 0 : index
    %c0_6 = arith.constant 0 : index
    %21 = vector.load %arg4[%c0_4, %c0_5, %c0_6] : memref<1x1x1024xi32, #tpu.memory_space<vmem>>, vector<1x1x1024xi32>
    %22 = vector.shape_cast %21 : vector<1x1x1024xi32> to vector<1x1024xi32>
    %23 = tpu.iota {dimensions = array<i32: 0>} : vector<24x1024xi32>
    %24 = vector.broadcast %22 : vector<1x1024xi32> to vector<24x1024xi32>
    %25 = arith.cmpi eq, %23, %24 : vector<24x1024xi32>
    %26 = vector.broadcast %12 : vector<1x1024xi1> to vector<24x1024xi1>
    %27 = arith.andi %25, %26 : vector<24x1024xi1>
    %cst_7 = arith.constant 1.000000e+00 : f32
    %cst_8 = arith.constant 0.000000e+00 : f32
    %28 = vector.broadcast %cst_7 : f32 to vector<24x1024xf32>
    %29 = vector.broadcast %cst_8 : f32 to vector<24x1024xf32>
    %30 = arith.select %27, %28, %29 : vector<24x1024xi1>, vector<24x1024xf32>
    %cst_9 = arith.constant dense<0xFF800000> : vector<1024xf32>
    %31 = vector.multi_reduction <maximumf>, %20, %cst_9 [0] : vector<24x1024xf32> to vector<1024xf32>
    %32 = vector.shape_cast %31 : vector<1024xf32> to vector<1x1024xf32>
    %33 = vector.broadcast %32 : vector<1x1024xf32> to vector<24x1024xf32>
    %34 = arith.subf %20, %33 : vector<24x1024xf32>
    %35 = math.exp %34 : vector<24x1024xf32>
    %cst_10 = arith.constant dense<0.000000e+00> : vector<1024xf32>
    %36 = vector.multi_reduction <add>, %35, %cst_10 [0] : vector<24x1024xf32> to vector<1024xf32>
    %37 = vector.shape_cast %36 : vector<1024xf32> to vector<1x1024xf32>
    %cst_11 = arith.constant 1.000000e+00 : f32
    %38 = vector.broadcast %cst_11 : f32 to vector<1x1024xf32>
    %39 = arith.divf %38, %37 : vector<1x1024xf32>
    %40 = vector.broadcast %39 : vector<1x1024xf32> to vector<24x1024xf32>
    %41 = arith.mulf %35, %40 : vector<24x1024xf32>
    %42 = math.log %37 : vector<1x1024xf32>
    %43 = arith.addf %42, %32 : vector<1x1024xf32>
    %c0_12 = arith.constant 0 : index
    %c0_13 = arith.constant 0 : index
    %c0_14 = arith.constant 0 : index
    %44 = vector.load %arg5[%c0_12, %c0_13, %c0_14] : memref<1x24x1xf32, #tpu.memory_space<vmem>>, vector<1x24x1xf32>
    %45 = vector.shape_cast %44 : vector<1x24x1xf32> to vector<24x1xf32>
    %46 = arith.mulf %41, %30 : vector<24x1024xf32>
    %cst_15 = arith.constant dense<0.000000e+00> : vector<24xf32>
    %47 = vector.multi_reduction <add>, %46, %cst_15 [1] : vector<24x1024xf32> to vector<24xf32>
    %48 = vector.shape_cast %47 : vector<24xf32> to vector<24x1xf32>
    %49 = arith.addf %45, %48 : vector<24x1xf32>
    %c0_16 = arith.constant 0 : index
    %c0_17 = arith.constant 0 : index
    %c0_18 = arith.constant 0 : index
    %50 = vector.load %arg5[%c0_16, %c0_17, %c0_18] : memref<1x24x1xf32, #tpu.memory_space<vmem>>, vector<1x24x1xf32>
    %51 = vector.shape_cast %50 : vector<1x24x1xf32> to vector<24x1xf32>
    %52 = vector.shape_cast %49 : vector<24x1xf32> to vector<1x24x1xf32>
    tpu.vector_store %arg5[%c0_16, %c0_17, %c0_18], %52 {strides = array<i32>} : memref<1x24x1xf32, #tpu.memory_space<vmem>>, vector<1x24x1xf32>,
    %c0_19 = arith.constant 0 : index
    %c0_20 = arith.constant 0 : index
    %c0_21 = arith.constant 0 : index
    %53 = vector.load %arg6[%c0_19, %c0_20, %c0_21] : memref<1x24x1xf32, #tpu.memory_space<vmem>>, vector<1x24x1xf32>
    %54 = vector.shape_cast %53 : vector<1x24x1xf32> to vector<24x1xf32>
    %55 = vector.broadcast %14 : vector<1x1024xf32> to vector<24x1024xf32>
    %56 = arith.mulf %41, %55 : vector<24x1024xf32>
    %cst_22 = arith.constant dense<0.000000e+00> : vector<24xf32>
    %57 = vector.multi_reduction <add>, %56, %cst_22 [1] : vector<24x1024xf32> to vector<24xf32>
    %58 = vector.shape_cast %57 : vector<24xf32> to vector<24x1xf32>
    %59 = arith.addf %54, %58 : vector<24x1xf32>
    %c0_23 = arith.constant 0 : index
    %c0_24 = arith.constant 0 : index
    %c0_25 = arith.constant 0 : index
    %60 = vector.load %arg6[%c0_23, %c0_24, %c0_25] : memref<1x24x1xf32, #tpu.memory_space<vmem>>, vector<1x24x1xf32>
    %61 = vector.shape_cast %60 : vector<1x24x1xf32> to vector<24x1xf32>
    %62 = vector.shape_cast %59 : vector<24x1xf32> to vector<1x24x1xf32>
    tpu.vector_store %arg6[%c0_23, %c0_24, %c0_25], %62 {strides = array<i32>} : memref<1x24x1xf32, #tpu.memory_space<vmem>>, vector<1x24x1xf32>,
    %c0_26 = arith.constant 0 : index
    %c0_27 = arith.constant 0 : index
    %c0_28 = arith.constant 0 : index
    %63 = vector.load %arg7[%c0_26, %c0_27, %c0_28] : memref<1x24x1xf32, #tpu.memory_space<vmem>>, vector<1x24x1xf32>
    %64 = vector.shape_cast %63 : vector<1x24x1xf32> to vector<24x1xf32>
    %cst_29 = arith.constant dense<0.000000e+00> : vector<24xf32>
    %65 = vector.multi_reduction <add>, %30, %cst_29 [1] : vector<24x1024xf32> to vector<24xf32>
    %66 = vector.shape_cast %65 : vector<24xf32> to vector<24x1xf32>
    %67 = arith.addf %64, %66 : vector<24x1xf32>
    %c0_30 = arith.constant 0 : index
    %c0_31 = arith.constant 0 : index
    %c0_32 = arith.constant 0 : index
    %68 = vector.load %arg7[%c0_30, %c0_31, %c0_32] : memref<1x24x1xf32, #tpu.memory_space<vmem>>, vector<1x24x1xf32>
    %69 = vector.shape_cast %68 : vector<1x24x1xf32> to vector<24x1xf32>
    %70 = vector.shape_cast %67 : vector<24x1xf32> to vector<1x24x1xf32>
    tpu.vector_store %arg7[%c0_30, %c0_31, %c0_32], %70 {strides = array<i32>} : memref<1x24x1xf32, #tpu.memory_space<vmem>>, vector<1x24x1xf32>,
    %c0_33 = arith.constant 0 : index
    %c0_34 = arith.constant 0 : index
    %c0_35 = arith.constant 0 : index
    %71 = vector.load %arg8[%c0_33, %c0_34, %c0_35] : memref<1x24x1xf32, #tpu.memory_space<vmem>>, vector<1x24x1xf32>
    %72 = vector.shape_cast %71 : vector<1x24x1xf32> to vector<24x1xf32>
    %73 = vector.broadcast %43 : vector<1x1024xf32> to vector<24x1024xf32>
    %74 = arith.subf %73, %20 : vector<24x1024xf32>
    %75 = arith.mulf %30, %74 : vector<24x1024xf32>
    %cst_36 = arith.constant dense<0.000000e+00> : vector<24xf32>
    %76 = vector.multi_reduction <add>, %75, %cst_36 [1] : vector<24x1024xf32> to vector<24xf32>
    %77 = vector.shape_cast %76 : vector<24xf32> to vector<24x1xf32>
    %78 = arith.addf %72, %77 : vector<24x1xf32>
    %c0_37 = arith.constant 0 : index
    %c0_38 = arith.constant 0 : index
    %c0_39 = arith.constant 0 : index
    %79 = vector.load %arg8[%c0_37, %c0_38, %c0_39] : memref<1x24x1xf32, #tpu.memory_space<vmem>>, vector<1x24x1xf32>
    %80 = vector.shape_cast %79 : vector<1x24x1xf32> to vector<24x1xf32>
    %81 = vector.shape_cast %78 : vector<24x1xf32> to vector<1x24x1xf32>
    tpu.vector_store %arg8[%c0_37, %c0_38, %c0_39], %81 {strides = array<i32>} : memref<1x24x1xf32, #tpu.memory_space<vmem>>, vector<1x24x1xf32>,
    return
  }
  func.func @transform_0(%arg0: i32, %arg1: i32, %arg2: i32) -> (i32, i32, i32) {
    %c2_i32 = arith.constant 2 : i32
    %0 = arith.muli %arg0, %c2_i32 : i32
    %1 = arith.addi %0, %arg2 : i32
    %c3_i32 = arith.constant 3 : i32
    %2 = arith.minsi %1, %c3_i32 : i32
    %c0_i32 = arith.constant 0 : i32
    %c0_i32_0 = arith.constant 0 : i32
    return %arg1, %c0_i32, %2 : i32, i32, i32
  }
  func.func @transform_1(%arg0: i32, %arg1: i32, %arg2: i32) -> (i32, i32, i32) {
    %c2_i32 = arith.constant 2 : i32
    %0 = arith.muli %arg0, %c2_i32 : i32
    %1 = arith.addi %0, %arg2 : i32
    %c3_i32 = arith.constant 3 : i32
    %2 = arith.minsi %1, %c3_i32 : i32
    %c0_i32 = arith.constant 0 : i32
    %c0_i32_0 = arith.constant 0 : i32
    return %arg1, %c0_i32, %2 : i32, i32, i32
  }
  func.func @transform_2(%arg0: i32, %arg1: i32, %arg2: i32) -> (i32, i32, i32) {
    %c0_i32 = arith.constant 0 : i32
    %c0_i32_0 = arith.constant 0 : i32
    %c0_i32_1 = arith.constant 0 : i32
    return %arg0, %c0_i32, %c0_i32_0 : i32, i32, i32
  }
  func.func @transform_3(%arg0: i32, %arg1: i32, %arg2: i32) -> (i32, i32, i32) {
    %c0_i32 = arith.constant 0 : i32
    %c0_i32_0 = arith.constant 0 : i32
    %c0_i32_1 = arith.constant 0 : i32
    return %arg0, %c0_i32, %c0_i32_0 : i32, i32, i32
  }
  func.func @transform_4(%arg0: i32, %arg1: i32, %arg2: i32) -> (i32, i32, i32) {
    %c0_i32 = arith.constant 0 : i32
    %c0_i32_0 = arith.constant 0 : i32
    %c0_i32_1 = arith.constant 0 : i32
    return %arg0, %c0_i32, %c0_i32_0 : i32, i32, i32
  }
  func.func @transform_5(%arg0: i32, %arg1: i32, %arg2: i32) -> (i32, i32, i32) {
    %c0_i32 = arith.constant 0 : i32
    %c0_i32_0 = arith.constant 0 : i32
    %c0_i32_1 = arith.constant 0 : i32
    return %arg0, %c0_i32, %c0_i32_0 : i32, i32, i32
  }
}

</mosaic_0001>

<llo_original>
// kernel: tpu_custom_call.1
$region0: #{tpu_custom_call.1}
  #allocation0 [shape = 'u32[]', space=smem, size = 0x4, offset = 0x4, fixed_abs, tag = 'smem constant byte address 0x4 - core index']
  #allocation1 [shape = 'u32[72,128]{1,0:T(1,128)}', space=vmem, size = 0x9000, scoped, tag = 'internal scratch']
  %s0 = inlined_call_operand.hbm [shape: f32[2,24,4080], index: 0, kind: input, shape index: {}]
  %s1 = inlined_call_operand.hbm [shape: s32[2,1,4080], index: 1, kind: input, shape index: {}]
  %s2 = inlined_call_operand.vmem [shape: f32[2,24,1], index: 2, kind: output, shape index: {0}]
  %s3 = inlined_call_operand.vmem [shape: f32[2,24,1], index: 3, kind: output, shape index: {1}]
  %s4 = inlined_call_operand.vmem [shape: f32[2,24,1], index: 4, kind: output, shape index: {2}]
  %s5 = inlined_call_operand.vmem [shape: f32[2,24,1], index: 5, kind: output, shape index: {3}]
  %6 = xla_tuple %s2, %s3, %s4, %s5
  %s7 = sld [smem:[#allocation0]]
  $region77: #{tpu_custom_call.1} parent=0
    _
  %s9 = ssub.s32 1, %s7
  %s10 = scalar_select 0, %s9, %s7
  $region1: #{tpu_custom_call.1} parent=0
    #allocation2 [shape = 'u8[196608]{0}', space=vmem, size = 0x30000, scoped, tag = 'input window, operand 0']
    #allocation3 [shape = 's32[2]{0}', space=sflag, size = 0x8, scoped, tag = 'scoped memory for tpu_custom_call.1']
    #allocation4 [shape = 'u8[8192]{0}', space=vmem, size = 0x2000, scoped, tag = 'input window, operand 1']
    #allocation5 [shape = 's32[2]{0}', space=sflag, size = 0x8, scoped, tag = 'scoped memory for tpu_custom_call.1']
    %11 = vsyncpa [#allocation3], 0
    %s12 = scalar_lea.sflag [#allocation3], 1
    %13 = vsyncpa %s12, 0
    %14 = vsyncpa [#allocation5], 0
    %s15 = scalar_lea.sflag [#allocation5], 1
    %16 = vsyncpa %s15, 0
    loop: start=0, step=1, limit=10
    $region2: #{tpu_custom_call.1} parent=1 // loop_pre_header
      _
    $region3: #{tpu_custom_call.1} parent=1 // loop_header
      %s18 = sphi 0, %s22
      %p19 = scmp.ge.s32.totalorder %s18, 10
      %s25 = sphi 0, %s44
      %s26 = sphi 0, %s40
      %s27 = sphi 0, %s36
      %s28 = sphi 0, %s25
      %s29 = sphi 0, %s26
      %s30 = sphi 0, %s27
      %s31 = sphi 0, %s28
      %s32 = sphi 0, %s29
      %s33 = sphi 0, %s30
      %s57 = sphi 0, %s59
      %s60 = sphi 0, %s57
      %s61 = sphi 0, %s60
      %s77 = sphi 0, %s61
      %s93 = sphi 0, %s95
      %s96 = sphi 0, %s93
      %s97 = sphi 0, %s96
      %s113 = sphi 0, %s97
      %s119 = sphi 0, %s121
      %s122 = sphi 0, %s119
      %s123 = sphi 0, %s122
      %s139 = sphi 0, %s123
      %s145 = sphi 0, %s147
      %s148 = sphi 0, %s145
      %s149 = sphi 0, %s148
      %s165 = sphi 0, %s149
      %s171 = sphi 0, %s173
      %s174 = sphi 0, %s171
      %s175 = sphi 0, %s174
      %s191 = sphi 0, %s175
      %s197 = sphi 0, %s199
      %s200 = sphi 0, %s197
      %s201 = sphi 0, %s200
      %s217 = sphi 0, %s201
    $region4: #{tpu_custom_call.1} parent=1 // loop_header_branch
      %21 = sbr.rel (%p19) target = $region8
    $region5: #{tpu_custom_call.1} parent=1 // loop_body
      %s23 = ssub.s32 %s18, 1
      %s24 = ssub.s32 %s18, 2
      %s34 = sadd.s32 1, %s27
      %p35 = scmp.ge.s32.totalorder %s34, 2
      %s36 = scalar_select %p35, 0, %s34
      %s37 = sadd.s32 1, %s26
      %s38 = scalar_select %p35, %s37, %s26
      %p39 = scmp.ge.s32.totalorder %s38, 2
      %s40 = scalar_select %p39, 0, %s38
      %s41 = sadd.s32 1, %s25
      %s42 = scalar_select %p39, %s41, %s25
      %p43 = scmp.ge.s32.totalorder %s42, 2
      %s44 = scalar_select %p43, 0, %s42
      %s45 = smul.u32 %s25, 2
      %s46 = sadd.s32 %s45, %s27
      %p47 = scmp.lt.s32.totalorder %s46, 3
      %s48 = scalar_select %p47, %s46, 3
      %s49 = smul.u32 %s44, 2
      %s50 = sadd.s32 %s49, %s36
      %p51 = scmp.lt.s32.totalorder %s50, 3
      %s52 = scalar_select %p51, %s50, 3
      %s53 = ssub.s32 %s26, %s40
      %s54 = ssub.s32 %s48, %s52
      %s55 = sor.u32 %s53, %s54
      %p56 = scmp.eq.s32.totalorder %s55, 0
      %s58 = sadd.s32 %s57, 1
      %s59 = scalar_select %p56, %s57, %s58
      %p62 = pneg %p56
      %p63 = scmp.eq.s32.totalorder %s18, 7
      %p64 = por %p62, %p63
      %p65 = scmp.ne.s32.totalorder %s57, %s60
      %p66 = scmp.eq.s32.totalorder %s18, 0
      %p67 = por %p65, %p66
      %p68 = scmp.ne.s32.totalorder %s57, %s60
      %p69 = scmp.eq.s32.totalorder %s23, 7
      %p70 = por %p68, %p69
      %p71 = scmp.ne.s32.totalorder %s60, %s61
      %p72 = scmp.eq.s32.totalorder %s23, 0
      %p73 = por %p71, %p72
      %p74 = scmp.ne.s32.totalorder %s60, %s61
      %p75 = scmp.eq.s32.totalorder %s24, 7
      %p76 = por %p74, %p75
      %p78 = scmp.ne.s32.totalorder %s61, %s77
      %p79 = scmp.eq.s32.totalorder %s24, 0
      %p80 = por %p78, %p79
      %s81 = smul.u32 %s25, 2
      %s82 = sadd.s32 %s81, %s27
      %p83 = scmp.lt.s32.totalorder %s82, 3
      %s84 = scalar_select %p83, %s82, 3
      %s85 = smul.u32 %s44, 2
      %s86 = sadd.s32 %s85, %s36
      %p87 = scmp.lt.s32.totalorder %s86, 3
      %s88 = scalar_select %p87, %s86, 3
      %s89 = ssub.s32 %s26, %s40
      %s90 = ssub.s32 %s84, %s88
      %s91 = sor.u32 %s89, %s90
      %p92 = scmp.eq.s32.totalorder %s91, 0
      %s94 = sadd.s32 %s93, 1
      %s95 = scalar_select %p92, %s93, %s94
      %p98 = pneg %p92
      %p99 = scmp.eq.s32.totalorder %s18, 7
      %p100 = por %p98, %p99
      %p101 = scmp.ne.s32.totalorder %s93, %s96
      %p102 = scmp.eq.s32.totalorder %s18, 0
      %p103 = por %p101, %p102
      %p104 = scmp.ne.s32.totalorder %s93, %s96
      %p105 = scmp.eq.s32.totalorder %s23, 7
      %p106 = por %p104, %p105
      %p107 = scmp.ne.s32.totalorder %s96, %s97
      %p108 = scmp.eq.s32.totalorder %s23, 0
      %p109 = por %p107, %p108
      %p110 = scmp.ne.s32.totalorder %s96, %s97
      %p111 = scmp.eq.s32.totalorder %s24, 7
      %p112 = por %p110, %p111
      %p114 = scmp.ne.s32.totalorder %s97, %s113
      %p115 = scmp.eq.s32.totalorder %s24, 0
      %p116 = por %p114, %p115
      %s117 = ssub.s32 %s25, %s44
      %p118 = scmp.eq.s32.totalorder %s117, 0
      %s120 = sadd.s32 %s119, 1
      %s121 = scalar_select %p118, %s119, %s120
      %p124 = pneg %p118
      %p125 = scmp.eq.s32.totalorder %s18, 7
      %p126 = por %p124, %p125
      %p127 = scmp.ne.s32.totalorder %s119, %s122
      %p128 = scmp.eq.s32.totalorder %s18, 0
      %p129 = por %p127, %p128
      %p130 = scmp.ne.s32.totalorder %s119, %s122
      %p131 = scmp.eq.s32.totalorder %s23, 7
      %p132 = por %p130, %p131
      %p133 = scmp.ne.s32.totalorder %s122, %s123
      %p134 = scmp.eq.s32.totalorder %s23, 0
      %p135 = por %p133, %p134
      %p136 = scmp.ne.s32.totalorder %s122, %s123
      %p137 = scmp.eq.s32.totalorder %s24, 7
      %p138 = por %p136, %p137
      %p140 = scmp.ne.s32.totalorder %s123, %s139
      %p141 = scmp.eq.s32.totalorder %s24, 0
      %p142 = por %p140, %p141
      %s143 = ssub.s32 %s25, %s44
      %p144 = scmp.eq.s32.totalorder %s143, 0
      %s146 = sadd.s32 %s145, 1
      %s147 = scalar_select %p144, %s145, %s146
      %p150 = pneg %p144
      %p151 = scmp.eq.s32.totalorder %s18, 7
      %p152 = por %p150, %p151
      %p153 = scmp.ne.s32.totalorder %s145, %s148
      %p154 = scmp.eq.s32.totalorder %s18, 0
      %p155 = por %p153, %p154
      %p156 = scmp.ne.s32.totalorder %s145, %s148
      %p157 = scmp.eq.s32.totalorder %s23, 7
      %p158 = por %p156, %p157
      %p159 = scmp.ne.s32.totalorder %s148, %s149
      %p160 = scmp.eq.s32.totalorder %s23, 0
      %p161 = por %p159, %p160
      %p162 = scmp.ne.s32.totalorder %s148, %s149
      %p163 = scmp.eq.s32.totalorder %s24, 7
      %p164 = por %p162, %p163
      %p166 = scmp.ne.s32.totalorder %s149, %s165
      %p167 = scmp.eq.s32.totalorder %s24, 0
      %p168 = por %p166, %p167
      %s169 = ssub.s32 %s25, %s44
      %p170 = scmp.eq.s32.totalorder %s169, 0
      %s172 = sadd.s32 %s171, 1
      %s173 = scalar_select %p170, %s171, %s172
      %p176 = pneg %p170
      %p177 = scmp.eq.s32.totalorder %s18, 7
      %p178 = por %p176, %p177
      %p179 = scmp.ne.s32.totalorder %s171, %s174
      %p180 = scmp.eq.s32.totalorder %s18, 0
      %p181 = por %p179, %p180
      %p182 = scmp.ne.s32.totalorder %s171, %s174
      %p183 = scmp.eq.s32.totalorder %s23, 7
      %p184 = por %p182, %p183
      %p185 = scmp.ne.s32.totalorder %s174, %s175
      %p186 = scmp.eq.s32.totalorder %s23, 0
      %p187 = por %p185, %p186
      %p188 = scmp.ne.s32.totalorder %s174, %s175
      %p189 = scmp.eq.s32.totalorder %s24, 7
      %p190 = por %p188, %p189
      %p192 = scmp.ne.s32.totalorder %s175, %s191
      %p193 = scmp.eq.s32.totalorder %s24, 0
      %p194 = por %p192, %p193
      %s195 = ssub.s32 %s25, %s44
      %p196 = scmp.eq.s32.totalorder %s195, 0
      %s198 = sadd.s32 %s197, 1
      %s199 = scalar_select %p196, %s197, %s198
      %p202 = pneg %p196
      %p203 = scmp.eq.s32.totalorder %s18, 7
      %p204 = por %p202, %p203
      %p205 = scmp.ne.s32.totalorder %s197, %s200
      %p206 = scmp.eq.s32.totalorder %s18, 0
      %p207 = por %p205, %p206
      %p208 = scmp.ne.s32.totalorder %s197, %s200
      %p209 = scmp.eq.s32.totalorder %s23, 7
      %p210 = por %p208, %p209
      %p211 = scmp.ne.s32.totalorder %s200, %s201
      %p212 = scmp.eq.s32.totalorder %s23, 0
      %p213 = por %p211, %p212
      %p214 = scmp.ne.s32.totalorder %s200, %s201
      %p215 = scmp.eq.s32.totalorder %s24, 7
      %p216 = por %p214, %p215
      %p218 = scmp.ne.s32.totalorder %s201, %s217
      %p219 = scmp.eq.s32.totalorder %s24, 0
      %p220 = por %p218, %p219
      %p221 = scmp.le.s32.totalorder 1, %s18
      %p222 = scmp.lt.s32.totalorder %s18, 9
      %p223 = pnand %p221, %p222
      %p224 = pneg %p223
      // Predicated region
      $region9: #{tpu_custom_call.1} parent=5 // pred_check
        _
      $region10: #{tpu_custom_call.1} parent=5 // pred_check_branch
        %226 = sbr.rel (%p223) target = $region12
      $region11: #{tpu_custom_call.1} parent=5 // pred_region
        %s227 = ssub.s32 %s18, 1
      $region12: #{tpu_custom_call.1} parent=5 // pred_fallthru
        _
      %p228 = scmp.lt.s32.totalorder %s18, 8
      // Predicated region
      $region13: #{tpu_custom_call.1} parent=5 // pred_check
        %p229 = pneg %p228
      $region14: #{tpu_custom_call.1} parent=5 // pred_check_branch
        %231 = sbr.rel (%p229) target = $region16
      $region15: #{tpu_custom_call.1} parent=5 // pred_region
        // Predicated region
        $region17: #{tpu_custom_call.1} parent=15 // pred_check
          %p232 = pneg %p67
        $region18: #{tpu_custom_call.1} parent=15 // pred_check_branch
          %234 = sbr.rel (%p232) target = $region20
        $region19: #{tpu_custom_call.1} parent=15 // pred_region
          %s235 = sand.u32 %s57, 1
          %s236 = scalar_lea.sflag [#allocation3], %s235
          %s237 = sand.u32 %s57, 1
          %s238 = smul.addr %s237, 192
          %s239 = scalar_lea.vmem [#allocation2], %s238
          %s240 = smul.u32 %s25, 2
          %s241 = sadd.s32 %s240, %s27
          %p242 = scmp.lt.s32.totalorder %s241, 3
          %s243 = scalar_select %p242, %s241, 3
          %s244 = smul.u32 8, %s243
          %246 = vsyncadd %s236, 0
          %s247 = smul.addr %s26, 96
          %s248 = sadd.s32 %s244, %s247
          %s249 = smul.addr %s248, 8
          %s250 = scalar_lea.hbm %s0, %s249
          %s251 = sshll.u32 %s250, 4
          %s252 = int_to_ptr.hbm [resolvable:$true] %s251
          %s253 = sshll.u32 %s239, 4
          %s254 = int_to_ptr.vmem [resolvable:$true] %s253
          %259 = dma.hbm_to_vmem [thread:$0]  %s252, 3072, %s254, %s236, 4096, 1024, 64
        $region20: #{tpu_custom_call.1} parent=15 // pred_fallthru
          _
        // Predicated region
        $region21: #{tpu_custom_call.1} parent=15 // pred_check
          %p260 = pneg %p103
        $region22: #{tpu_custom_call.1} parent=15 // pred_check_branch
          %262 = sbr.rel (%p260) target = $region24
        $region23: #{tpu_custom_call.1} parent=15 // pred_region
          %s263 = sand.u32 %s93, 1
          %s264 = scalar_lea.sflag [#allocation5], %s263
          %s265 = sand.u32 %s93, 1
          %s266 = smul.addr %s265, 8
          %s267 = scalar_lea.vmem [#allocation4], %s266
          %s268 = smul.u32 %s25, 2
          %s269 = sadd.s32 %s268, %s27
          %p270 = scmp.lt.s32.totalorder %s269, 3
          %s271 = scalar_select %p270, %s269, 3
          %s272 = smul.u32 8, %s271
          %274 = vsyncadd %s264, 0
          %s275 = smul.addr %s26, 32
          %s276 = sadd.s32 %s272, %s275
          %s277 = scalar_lea.hbm %s1, %s276
          %s279 = sshll.u32 %s277, 4
          %s280 = int_to_ptr.hbm [resolvable:$true] %s279
          %s281 = sshll.u32 %s267, 4
          %s282 = int_to_ptr.vmem [resolvable:$true] %s281
          %284 = dma.hbm_to_vmem [thread:$0]  %s280, 128, %s282, %s264
        $region24: #{tpu_custom_call.1} parent=15 // pred_fallthru
          _
      $region16: #{tpu_custom_call.1} parent=5 // pred_fallthru
        _
      %p285 = scmp.le.s32.totalorder 1, %s18
      %p286 = scmp.lt.s32.totalorder %s18, 9
      %p287 = pnand %p285, %p286
      %p288 = pneg %p287
      // Predicated region
      $region25: #{tpu_custom_call.1} parent=5 // pred_check
        _
      $region26: #{tpu_custom_call.1} parent=5 // pred_check_branch
        %290 = sbr.rel (%p287) target = $region28
      $region27: #{tpu_custom_call.1} parent=5 // pred_region
        %s291 = ssub.s32 %s18, 1
        %s292 = sand.u32 %s60, 1
        %s293 = scalar_lea.sflag [#allocation3], %s292
        %s294 = sand.u32 %s60, 1
        %s295 = smul.addr %s294, 192
        %s296 = scalar_lea.vmem [#allocation2], %s295
        // Predicated region
        $region29: #{tpu_custom_call.1} parent=27 // pred_check
          %p297 = pneg %p73
        $region30: #{tpu_custom_call.1} parent=27 // pred_check_branch
          %299 = sbr.rel (%p297) target = $region32
        $region31: #{tpu_custom_call.1} parent=27 // pred_region
          %301 = dma.done %s293, 3072
        $region32: #{tpu_custom_call.1} parent=27 // pred_fallthru
          _
        %s302 = sand.u32 %s96, 1
        %s303 = scalar_lea.sflag [#allocation5], %s302
        %s304 = sand.u32 %s96, 1
        %s305 = smul.addr %s304, 8
        %s306 = scalar_lea.vmem [#allocation4], %s305
        // Predicated region
        $region33: #{tpu_custom_call.1} parent=27 // pred_check
          %p307 = pneg %p109
        $region34: #{tpu_custom_call.1} parent=27 // pred_check_branch
          %309 = sbr.rel (%p307) target = $region36
        $region35: #{tpu_custom_call.1} parent=27 // pred_region
          %311 = dma.done %s303, 128
        $region36: #{tpu_custom_call.1} parent=27 // pred_fallthru
          _
        %s312 = sand.u32 %s60, 1
        %s313 = scalar_lea.sflag [#allocation3], %s312
        %s314 = sand.u32 %s60, 1
        %s315 = smul.addr %s314, 192
        %s316 = scalar_lea.vmem [#allocation2], %s315
        %p317 = pneg %p73
        %p318 = pneg %p70
        %s319 = sand.u32 %s96, 1
        %s320 = scalar_lea.sflag [#allocation5], %s319
        %s321 = sand.u32 %s96, 1
        %s322 = smul.addr %s321, 8
        %s323 = scalar_lea.vmem [#allocation4], %s322
        %p324 = pneg %p109
        %p325 = pneg %p106
        %p326 = pneg %p135
        %p327 = pneg %p132
        %p328 = scmp.lt.s32.totalorder %s28, 1
        %s329 = scalar_select %p328, %s28, 1
        %s330 = smul.addr %s329, 3
        %s331 = smul.addr %s330, 8
        %s332 = scalar_lea.vmem %s2, %s331
        %p333 = pneg %p161
        %p334 = pneg %p158
        %p335 = scmp.lt.s32.totalorder %s28, 1
        %s336 = scalar_select %p335, %s28, 1
        %s337 = smul.addr %s336, 3
        %s338 = smul.addr %s337, 8
        %s339 = scalar_lea.vmem %s3, %s338
        %p340 = pneg %p187
        %p341 = pneg %p184
        %p342 = scmp.lt.s32.totalorder %s28, 1
        %s343 = scalar_select %p342, %s28, 1
        %s344 = smul.addr %s343, 3
        %s345 = smul.addr %s344, 8
        %s346 = scalar_lea.vmem %s4, %s345
        %p347 = pneg %p213
        %p348 = pneg %p210
        %p349 = scmp.lt.s32.totalorder %s28, 1
        %s350 = scalar_select %p349, %s28, 1
        %s351 = smul.addr %s350, 3
        %s352 = smul.addr %s351, 8
        %s353 = scalar_lea.vmem %s5, %s352
        %s354 = smul.u32 %s28, 2
        %s355 = sadd.s32 %s354, %s30
        %p356 = scmp.lt.s32.totalorder %s355, 3
        %s357 = scalar_select %p356, %s355, 3
        %s358 = smul.u32 8, %s357
        %s359 = smul.u32 %s28, 2
        %s360 = sadd.s32 %s359, %s30
        %p361 = scmp.lt.s32.totalorder %s360, 3
        %s362 = scalar_select %p361, %s360, 3
        %s363 = smul.u32 8, %s362
        %p364 = scmp.lt.s32.totalorder %s28, 1
        %s365 = scalar_select %p364, %s28, 1
        %s366 = smul.addr %s365, 3
        %s367 = smul.addr %s366, 8
        %s368 = scalar_lea.vmem %s2, %s367
        %p369 = scmp.lt.s32.totalorder %s28, 1
        %s370 = scalar_select %p369, %s28, 1
        %s371 = smul.addr %s370, 3
        %s372 = smul.addr %s371, 8
        %s373 = scalar_lea.vmem %s3, %s372
        %p374 = scmp.lt.s32.totalorder %s28, 1
        %s375 = scalar_select %p374, %s28, 1
        %s376 = smul.addr %s375, 3
        %s377 = smul.addr %s376, 8
        %s378 = scalar_lea.vmem %s4, %s377
        %p379 = scmp.lt.s32.totalorder %s28, 1
        %s380 = scalar_select %p379, %s28, 1
        %s381 = smul.addr %s380, 3
        %s382 = smul.addr %s381, 8
        %s383 = scalar_lea.vmem %s5, %s382
        %p384 = scmp.eq.s32.totalorder %s29, 0
        %p385 = scmp.eq.s32.totalorder %s30, 0
        %p386 = pnand %p384, %p385
        %p387 = pneg %p386
        // Predicated region
        $region37: #{tpu_custom_call.1} parent=27 // pred_check
          _
        $region38: #{tpu_custom_call.1} parent=27 // pred_check_branch
          %389 = sbr.rel (%p386) target = $region40
        $region39: #{tpu_custom_call.1} parent=27 // pred_region
          %vm390 = vcmask 7168
          %391 = vst.msk [vmem:[%s368] sm:$0xff] %vm390, 0.0
          %392 = vst.msk [vmem:[%s368 + $0x8] sm:$0xff] %vm390, 0.0
          %393 = vst.msk [vmem:[%s368 + $0x10] sm:$0xff] %vm390, 0.0
          %394 = vst.msk [vmem:[%s373] sm:$0xff] %vm390, 0.0
          %395 = vst.msk [vmem:[%s373 + $0x8] sm:$0xff] %vm390, 0.0
          %396 = vst.msk [vmem:[%s373 + $0x10] sm:$0xff] %vm390, 0.0
          %397 = vst.msk [vmem:[%s378] sm:$0xff] %vm390, 0.0
          %398 = vst.msk [vmem:[%s378 + $0x8] sm:$0xff] %vm390, 0.0
          %399 = vst.msk [vmem:[%s378 + $0x10] sm:$0xff] %vm390, 0.0
          %400 = vst.msk [vmem:[%s383] sm:$0xff] %vm390, 0.0
          %401 = vst.msk [vmem:[%s383 + $0x8] sm:$0xff] %vm390, 0.0
          %402 = vst.msk [vmem:[%s383 + $0x10] sm:$0xff] %vm390, 0.0
        $region40: #{tpu_custom_call.1} parent=27 // pred_fallthru
          _
        %s403 = smul.u32 %s28, 2
        %s404 = sadd.s32 %s403, %s30
        %s405 = smul.u32 %s404, 1024
        %v406 = vlaneseq
        %v407 = vand.u32 %v406, 127
        %v408 = vadd.s32 %v407, 128
        %v409 = vadd.s32 %v407, 256
        %v410 = vadd.s32 %v407, 384
        %v411 = vadd.s32 %v407, 512
        %v412 = vadd.s32 %v407, 640
        %v413 = vadd.s32 %v407, 768
        %v414 = vadd.s32 %v407, 896
        %v415 = vstv %s405
        %v416 = vadd.s32 %v407, %v415
        %v417 = vadd.s32 %v408, %v415
        %v418 = vadd.s32 %v409, %v415
        %v419 = vadd.s32 %v410, %v415
        %v420 = vadd.s32 %v411, %v415
        %v421 = vadd.s32 %v412, %v415
        %v422 = vadd.s32 %v413, %v415
        %v423 = vadd.s32 %v414, %v415
        %vm424 = vcmp.lt.s32.totalorder %v416, 4080
        %vm425 = vcmp.lt.s32.totalorder %v417, 4080
        %vm426 = vcmp.lt.s32.totalorder %v418, 4080
        %vm427 = vcmp.lt.s32.totalorder %v419, 4080
        %vm428 = vcmp.lt.s32.totalorder %v420, 4080
        %vm429 = vcmp.lt.s32.totalorder %v421, 4080
        %vm430 = vcmp.lt.s32.totalorder %v422, 4080
        %vm431 = vcmp.lt.s32.totalorder %v423, 4080
        %v432 = vsel %vm424, 1, 0
        %v433 = vsel %vm425, 1, 0
        %v434 = vsel %vm426, 1, 0
        %v435 = vsel %vm427, 1, 0
        %v436 = vsel %vm428, 1, 0
        %v437 = vsel %vm429, 1, 0
        %v438 = vsel %vm430, 1, 0
        %v439 = vsel %vm431, 1, 0
        %v440 = vcvt.s32.f32 %v432
        %v441 = vcvt.s32.f32 %v433
        %v442 = vcvt.s32.f32 %v434
        %v443 = vcvt.s32.f32 %v435
        %v444 = vcvt.s32.f32 %v436
        %v445 = vcvt.s32.f32 %v437
        %v446 = vcvt.s32.f32 %v438
        %v447 = vcvt.s32.f32 %v439
        %v448 = vld [vmem:[%s296] sm:$0xff]
        %v449 = vld [vmem:[%s296 + $0x8] sm:$0xff]
        %v450 = vld [vmem:[%s296 + $0x10] sm:$0xff]
        %v451 = vld [vmem:[%s296 + $0x18] sm:$0xff]
        %v452 = vld [vmem:[%s296 + $0x20] sm:$0xff]
        %v453 = vld [vmem:[%s296 + $0x28] sm:$0xff]
        %v454 = vld [vmem:[%s296 + $0x30] sm:$0xff]
        %v455 = vld [vmem:[%s296 + $0x38] sm:$0xff]
        %v456 = vld [vmem:[%s296 + $0x40] sm:$0xff]
        %v457 = vld [vmem:[%s296 + $0x48] sm:$0xff]
        %v458 = vld [vmem:[%s296 + $0x50] sm:$0xff]
        %v459 = vld [vmem:[%s296 + $0x58] sm:$0xff]
        %v460 = vld [vmem:[%s296 + $0x60] sm:$0xff]
        %v461 = vld [vmem:[%s296 + $0x68] sm:$0xff]
        %v462 = vld [vmem:[%s296 + $0x70] sm:$0xff]
        %v463 = vld [vmem:[%s296 + $0x78] sm:$0xff]
        %v464 = vld [vmem:[%s296 + $0x80] sm:$0xff]
        %v465 = vld [vmem:[%s296 + $0x88] sm:$0xff]
        %v466 = vld [vmem:[%s296 + $0x90] sm:$0xff]
        %v467 = vld [vmem:[%s296 + $0x98] sm:$0xff]
        %v468 = vld [vmem:[%s296 + $0xa0] sm:$0xff]
        %v469 = vld [vmem:[%s296 + $0xa8] sm:$0xff]
        %v470 = vld [vmem:[%s296 + $0xb0] sm:$0xff]
        %v471 = vld [vmem:[%s296 + $0xb8] sm:$0xff]
        %vm472 = vcmp.eq.s32.totalorder %v432, 1
        %vm473 = vcmp.eq.s32.totalorder %v433, 1
        %vm474 = vcmp.eq.s32.totalorder %v434, 1
        %vm475 = vcmp.eq.s32.totalorder %v435, 1
        %vm476 = vcmp.eq.s32.totalorder %v436, 1
        %vm477 = vcmp.eq.s32.totalorder %v437, 1
        %vm478 = vcmp.eq.s32.totalorder %v438, 1
        %vm479 = vcmp.eq.s32.totalorder %v439, 1
        %v480 = vsel %vm472, %v448, 0.0
        %v481 = vsel %vm473, %v449, 0.0
        %v482 = vsel %vm474, %v450, 0.0
        %v483 = vsel %vm475, %v451, 0.0
        %v484 = vsel %vm476, %v452, 0.0
        %v485 = vsel %vm477, %v453, 0.0
        %v486 = vsel %vm478, %v454, 0.0
        %v487 = vsel %vm479, %v455, 0.0
        %v488 = vsel %vm472, %v456, 0.0
        %v489 = vsel %vm473, %v457, 0.0
        %v490 = vsel %vm474, %v458, 0.0
        %v491 = vsel %vm475, %v459, 0.0
        %v492 = vsel %vm476, %v460, 0.0
        %v493 = vsel %vm477, %v461, 0.0
        %v494 = vsel %vm478, %v462, 0.0
        %v495 = vsel %vm479, %v463, 0.0
        %v496 = vsel %vm472, %v464, 0.0
        %v497 = vsel %vm473, %v465, 0.0
        %v498 = vsel %vm474, %v466, 0.0
        %v499 = vsel %vm475, %v467, 0.0
        %v500 = vsel %vm476, %v468, 0.0
        %v501 = vsel %vm477, %v469, 0.0
        %v502 = vsel %vm478, %v470, 0.0
        %v503 = vsel %vm479, %v471, 0.0
        %v504 = vld [vmem:[%s306] sm:$0xff]
        %v505 = vlaneseq
        %v506 = vshrl.u32 %v505, 7
        %v507 = vadd.s32 %v506, 8
        %v508 = vadd.s32 %v506, 16
        %v509 = vperm.slane %v504, 0
        %v510 = vperm.slane %v504, 1
        %v511 = vperm.slane %v504, 2
        %v512 = vperm.slane %v504, 3
        %v513 = vperm.slane %v504, 4
        %v514 = vperm.slane %v504, 5
        %v515 = vperm.slane %v504, 6
        %v516 = vperm.slane %v504, 7
        %vm517 = vcmp.eq.s32.totalorder %v506, %v509
        %vm518 = vcmp.eq.s32.totalorder %v506, %v510
        %vm519 = vcmp.eq.s32.totalorder %v506, %v511
        %vm520 = vcmp.eq.s32.totalorder %v506, %v512
        %vm521 = vcmp.eq.s32.totalorder %v506, %v513
        %vm522 = vcmp.eq.s32.totalorder %v506, %v514
        %vm523 = vcmp.eq.s32.totalorder %v506, %v515
        %vm524 = vcmp.eq.s32.totalorder %v506, %v516
        %vm525 = vcmp.eq.s32.totalorder %v507, %v509
        %vm526 = vcmp.eq.s32.totalorder %v507, %v510
        %vm527 = vcmp.eq.s32.totalorder %v507, %v511
        %vm528 = vcmp.eq.s32.totalorder %v507, %v512
        %vm529 = vcmp.eq.s32.totalorder %v507, %v513
        %vm530 = vcmp.eq.s32.totalorder %v507, %v514
        %vm531 = vcmp.eq.s32.totalorder %v507, %v515
        %vm532 = vcmp.eq.s32.totalorder %v507, %v516
        %vm533 = vcmp.eq.s32.totalorder %v508, %v509
        %vm534 = vcmp.eq.s32.totalorder %v508, %v510
        %vm535 = vcmp.eq.s32.totalorder %v508, %v511
        %vm536 = vcmp.eq.s32.totalorder %v508, %v512
        %vm537 = vcmp.eq.s32.totalorder %v508, %v513
        %vm538 = vcmp.eq.s32.totalorder %v508, %v514
        %vm539 = vcmp.eq.s32.totalorder %v508, %v515
        %vm540 = vcmp.eq.s32.totalorder %v508, %v516
        %vm541 = vmand %vm517, %vm472
        %vm542 = vmand %vm518, %vm473
        %vm543 = vmand %vm519, %vm474
        %vm544 = vmand %vm520, %vm475
        %vm545 = vmand %vm521, %vm476
        %vm546 = vmand %vm522, %vm477
        %vm547 = vmand %vm523, %vm478
        %vm548 = vmand %vm524, %vm479
        %vm549 = vmand %vm525, %vm472
        %vm550 = vmand %vm526, %vm473
        %vm551 = vmand %vm527, %vm474
        %vm552 = vmand %vm528, %vm475
        %vm553 = vmand %vm529, %vm476
        %vm554 = vmand %vm530, %vm477
        %vm555 = vmand %vm531, %vm478
        %vm556 = vmand %vm532, %vm479
        %vm557 = vmand %vm533, %vm472
        %vm558 = vmand %vm534, %vm473
        %vm559 = vmand %vm535, %vm474
        %vm560 = vmand %vm536, %vm475
        %vm561 = vmand %vm537, %vm476
        %vm562 = vmand %vm538, %vm477
        %vm563 = vmand %vm539, %vm478
        %vm564 = vmand %vm540, %vm479
        %v565 = vsel %vm541, 1.0, 0.0
        %v566 = vsel %vm542, 1.0, 0.0
        %v567 = vsel %vm543, 1.0, 0.0
        %v568 = vsel %vm544, 1.0, 0.0
        %v569 = vsel %vm545, 1.0, 0.0
        %v570 = vsel %vm546, 1.0, 0.0
        %v571 = vsel %vm547, 1.0, 0.0
        %v572 = vsel %vm548, 1.0, 0.0
        %v573 = vsel %vm549, 1.0, 0.0
        %v574 = vsel %vm550, 1.0, 0.0
        %v575 = vsel %vm551, 1.0, 0.0
        %v576 = vsel %vm552, 1.0, 0.0
        %v577 = vsel %vm553, 1.0, 0.0
        %v578 = vsel %vm554, 1.0, 0.0
        %v579 = vsel %vm555, 1.0, 0.0
        %v580 = vsel %vm556, 1.0, 0.0
        %v581 = vsel %vm557, 1.0, 0.0
        %v582 = vsel %vm558, 1.0, 0.0
        %v583 = vsel %vm559, 1.0, 0.0
        %v584 = vsel %vm560, 1.0, 0.0
        %v585 = vsel %vm561, 1.0, 0.0
        %v586 = vsel %vm562, 1.0, 0.0
        %v587 = vsel %vm563, 1.0, 0.0
        %v588 = vsel %vm564, 1.0, 0.0
        %v589 = vmax.f32 %v480, %v488
        %v590 = vmax.f32 %v589, %v496
        %v591 = vrot.slane %v590, 4
        %v592 = vmax.f32 %v590, %v591
        %v593 = vrot.slane %v592, 2
        %v594 = vmax.f32 %v592, %v593
        %v595 = vrot.slane %v594, 1
        %v596 = vmax.f32 %v594, %v595
        %v597 = vmax.f32 %v481, %v489
        %v598 = vmax.f32 %v597, %v497
        %v599 = vrot.slane %v598, 4
        %v600 = vmax.f32 %v598, %v599
        %v601 = vrot.slane %v600, 2
        %v602 = vmax.f32 %v600, %v601
        %v603 = vrot.slane %v602, 1
        %v604 = vmax.f32 %v602, %v603
        %v605 = vmax.f32 %v482, %v490
        %v606 = vmax.f32 %v605, %v498
        %v607 = vrot.slane %v606, 4
        %v608 = vmax.f32 %v606, %v607
        %v609 = vrot.slane %v608, 2
        %v610 = vmax.f32 %v608, %v609
        %v611 = vrot.slane %v610, 1
        %v612 = vmax.f32 %v610, %v611
        %v613 = vmax.f32 %v483, %v491
        %v614 = vmax.f32 %v613, %v499
        %v615 = vrot.slane %v614, 4
        %v616 = vmax.f32 %v614, %v615
        %v617 = vrot.slane %v616, 2
        %v618 = vmax.f32 %v616, %v617
        %v619 = vrot.slane %v618, 1
        %v620 = vmax.f32 %v618, %v619
        %v621 = vmax.f32 %v484, %v492
        %v622 = vmax.f32 %v621, %v500
        %v623 = vrot.slane %v622, 4
        %v624 = vmax.f32 %v622, %v623
        %v625 = vrot.slane %v624, 2
        %v626 = vmax.f32 %v624, %v625
        %v627 = vrot.slane %v626, 1
        %v628 = vmax.f32 %v626, %v627
        %v629 = vmax.f32 %v485, %v493
        %v630 = vmax.f32 %v629, %v501
        %v631 = vrot.slane %v630, 4
        %v632 = vmax.f32 %v630, %v631
        %v633 = vrot.slane %v632, 2
        %v634 = vmax.f32 %v632, %v633
        %v635 = vrot.slane %v634, 1
        %v636 = vmax.f32 %v634, %v635
        %v637 = vmax.f32 %v486, %v494
        %v638 = vmax.f32 %v637, %v502
        %v639 = vrot.slane %v638, 4
        %v640 = vmax.f32 %v638, %v639
        %v641 = vrot.slane %v640, 2
        %v642 = vmax.f32 %v640, %v641
        %v643 = vrot.slane %v642, 1
        %v644 = vmax.f32 %v642, %v643
        %v645 = vmax.f32 %v487, %v495
        %v646 = vmax.f32 %v645, %v503
        %v647 = vrot.slane %v646, 4
        %v648 = vmax.f32 %v646, %v647
        %v649 = vrot.slane %v648, 2
        %v650 = vmax.f32 %v648, %v649
        %v651 = vrot.slane %v650, 1
        %v652 = vmax.f32 %v650, %v651
        %v653 = vsub.f32 %v480, %v596
        %v654 = vsub.f32 %v481, %v604
        %v655 = vsub.f32 %v482, %v612
        %v656 = vsub.f32 %v483, %v620
        %v657 = vsub.f32 %v484, %v628
        %v658 = vsub.f32 %v485, %v636
        %v659 = vsub.f32 %v486, %v644
        %v660 = vsub.f32 %v487, %v652
        %v661 = vsub.f32 %v488, %v596
        %v662 = vsub.f32 %v489, %v604
        %v663 = vsub.f32 %v490, %v612
        %v664 = vsub.f32 %v491, %v620
        %v665 = vsub.f32 %v492, %v628
        %v666 = vsub.f32 %v493, %v636
        %v667 = vsub.f32 %v494, %v644
        %v668 = vsub.f32 %v495, %v652
        %v669 = vsub.f32 %v496, %v596
        %v670 = vsub.f32 %v497, %v604
        %v671 = vsub.f32 %v498, %v612
        %v672 = vsub.f32 %v499, %v620
        %v673 = vsub.f32 %v500, %v628
        %v674 = vsub.f32 %v501, %v636
        %v675 = vsub.f32 %v502, %v644
        %v676 = vsub.f32 %v503, %v652
        %v677 = vmul.f32 %v653, 1.442695
        %v678 = vpow.pop %v677
        %v679 = vmul.f32 %v654, 1.442695
        %v680 = vpow.pop %v679
        %v681 = vmul.f32 %v655, 1.442695
        %v682 = vpow.pop %v681
        %v683 = vmul.f32 %v656, 1.442695
        %v684 = vpow.pop %v683
        %v685 = vmul.f32 %v657, 1.442695
        %v686 = vpow.pop %v685
        %v687 = vmul.f32 %v658, 1.442695
        %v688 = vpow.pop %v687
        %v689 = vmul.f32 %v659, 1.442695
        %v690 = vpow.pop %v689
        %v691 = vmul.f32 %v660, 1.442695
        %v692 = vpow.pop %v691
        %v693 = vmul.f32 %v661, 1.442695
        %v694 = vpow.pop %v693
        %v695 = vmul.f32 %v662, 1.442695
        %v696 = vpow.pop %v695
        %v697 = vmul.f32 %v663, 1.442695
        %v698 = vpow.pop %v697
        %v699 = vmul.f32 %v664, 1.442695
        %v700 = vpow.pop %v699
        %v701 = vmul.f32 %v665, 1.442695
        %v702 = vpow.pop %v701
        %v703 = vmul.f32 %v666, 1.442695
        %v704 = vpow.pop %v703
        %v705 = vmul.f32 %v667, 1.442695
        %v706 = vpow.pop %v705
        %v707 = vmul.f32 %v668, 1.442695
        %v708 = vpow.pop %v707
        %v709 = vmul.f32 %v669, 1.442695
        %v710 = vpow.pop %v709
        %v711 = vmul.f32 %v670, 1.442695
        %v712 = vpow.pop %v711
        %v713 = vmul.f32 %v671, 1.442695
        %v714 = vpow.pop %v713
        %v715 = vmul.f32 %v672, 1.442695
        %v716 = vpow.pop %v715
        %v717 = vmul.f32 %v673, 1.442695
        %v718 = vpow.pop %v717
        %v719 = vmul.f32 %v674, 1.442695
        %v720 = vpow.pop %v719
        %v721 = vmul.f32 %v675, 1.442695
        %v722 = vpow.pop %v721
        %v723 = vmul.f32 %v676, 1.442695
        %v724 = vpow.pop %v723
        %v725 = vadd.f32 %v678, %v694
        %v726 = vadd.f32 %v725, %v710
        %v727 = vrot.slane %v726, 4
        %v728 = vadd.f32 %v726, %v727
        %v729 = vrot.slane %v728, 2
        %v730 = vadd.f32 %v728, %v729
        %v731 = vrot.slane %v730, 1
        %v732 = vadd.f32 %v730, %v731
        %v733 = vadd.f32 %v680, %v696
        %v734 = vadd.f32 %v733, %v712
        %v735 = vrot.slane %v734, 4
        %v736 = vadd.f32 %v734, %v735
        %v737 = vrot.slane %v736, 2
        %v738 = vadd.f32 %v736, %v737
        %v739 = vrot.slane %v738, 1
        %v740 = vadd.f32 %v738, %v739
        %v741 = vadd.f32 %v682, %v698
        %v742 = vadd.f32 %v741, %v714
        %v743 = vrot.slane %v742, 4
        %v744 = vadd.f32 %v742, %v743
        %v745 = vrot.slane %v744, 2
        %v746 = vadd.f32 %v744, %v745
        %v747 = vrot.slane %v746, 1
        %v748 = vadd.f32 %v746, %v747
        %v749 = vadd.f32 %v684, %v700
        %v750 = vadd.f32 %v749, %v716
        %v751 = vrot.slane %v750, 4
        %v752 = vadd.f32 %v750, %v751
        %v753 = vrot.slane %v752, 2
        %v754 = vadd.f32 %v752, %v753
        %v755 = vrot.slane %v754, 1
        %v756 = vadd.f32 %v754, %v755
        %v757 = vadd.f32 %v686, %v702
        %v758 = vadd.f32 %v757, %v718
        %v759 = vrot.slane %v758, 4
        %v760 = vadd.f32 %v758, %v759
        %v761 = vrot.slane %v760, 2
        %v762 = vadd.f32 %v760, %v761
        %v763 = vrot.slane %v762, 1
        %v764 = vadd.f32 %v762, %v763
        %v765 = vadd.f32 %v688, %v704
        %v766 = vadd.f32 %v765, %v720
        %v767 = vrot.slane %v766, 4
        %v768 = vadd.f32 %v766, %v767
        %v769 = vrot.slane %v768, 2
        %v770 = vadd.f32 %v768, %v769
        %v771 = vrot.slane %v770, 1
        %v772 = vadd.f32 %v770, %v771
        %v773 = vadd.f32 %v690, %v706
        %v774 = vadd.f32 %v773, %v722
        %v775 = vrot.slane %v774, 4
        %v776 = vadd.f32 %v774, %v775
        %v777 = vrot.slane %v776, 2
        %v778 = vadd.f32 %v776, %v777
        %v779 = vrot.slane %v778, 1
        %v780 = vadd.f32 %v778, %v779
        %v781 = vadd.f32 %v692, %v708
        %v782 = vadd.f32 %v781, %v724
        %v783 = vrot.slane %v782, 4
        %v784 = vadd.f32 %v782, %v783
        %v785 = vrot.slane %v784, 2
        %v786 = vadd.f32 %v784, %v785
        %v787 = vrot.slane %v786, 1
        %v788 = vadd.f32 %v786, %v787
        %v789 = vrcp.pop %v732
        %v790 = vmul.f32 %v732, %v789
        %v791 = vsub.f32 1.0, %v790
        %v792 = vmul.f32 %v789, %v791
        %v793 = vadd.f32 %v789, %v792
        %vm794 = vweird.f32 %v732
        %vm795 = vweird.f32 %v789
        %vm796 = vmor %vm794, %vm795
        %v797 = vsel %vm796, %v789, %v793
        %v798 = vand.u32 2147483647, %v732
        %vm799 = vcmp.eq.f32.partialorder %v798, 8.507059e+37
        %v800 = vand.u32 %v732, 2147483648
        %v801 = vor.u32 1.1754944e-38, %v800
        %v802 = vsel %vm799, %v801, %v797
        %v803 = vmul.f32 1.0, %v802
        %v804 = vrcp.pop %v740
        %v805 = vmul.f32 %v740, %v804
        %v806 = vsub.f32 1.0, %v805
        %v807 = vmul.f32 %v804, %v806
        %v808 = vadd.f32 %v804, %v807
        %vm809 = vweird.f32 %v740
        %vm810 = vweird.f32 %v804
        %vm811 = vmor %vm809, %vm810
        %v812 = vsel %vm811, %v804, %v808
        %v813 = vand.u32 2147483647, %v740
        %vm814 = vcmp.eq.f32.partialorder %v813, 8.507059e+37
        %v815 = vand.u32 %v740, 2147483648
        %v816 = vor.u32 1.1754944e-38, %v815
        %v817 = vsel %vm814, %v816, %v812
        %v818 = vmul.f32 1.0, %v817
        %v819 = vrcp.pop %v748
        %v820 = vmul.f32 %v748, %v819
        %v821 = vsub.f32 1.0, %v820
        %v822 = vmul.f32 %v819, %v821
        %v823 = vadd.f32 %v819, %v822
        %vm824 = vweird.f32 %v748
        %vm825 = vweird.f32 %v819
        %vm826 = vmor %vm824, %vm825
        %v827 = vsel %vm826, %v819, %v823
        %v828 = vand.u32 2147483647, %v748
        %vm829 = vcmp.eq.f32.partialorder %v828, 8.507059e+37
        %v830 = vand.u32 %v748, 2147483648
        %v831 = vor.u32 1.1754944e-38, %v830
        %v832 = vsel %vm829, %v831, %v827
        %v833 = vmul.f32 1.0, %v832
        %v834 = vrcp.pop %v756
        %v835 = vmul.f32 %v756, %v834
        %v836 = vsub.f32 1.0, %v835
        %v837 = vmul.f32 %v834, %v836
        %v838 = vadd.f32 %v834, %v837
        %vm839 = vweird.f32 %v756
        %vm840 = vweird.f32 %v834
        %vm841 = vmor %vm839, %vm840
        %v842 = vsel %vm841, %v834, %v838
        %v843 = vand.u32 2147483647, %v756
        %vm844 = vcmp.eq.f32.partialorder %v843, 8.507059e+37
        %v845 = vand.u32 %v756, 2147483648
        %v846 = vor.u32 1.1754944e-38, %v845
        %v847 = vsel %vm844, %v846, %v842
        %v848 = vmul.f32 1.0, %v847
        %v849 = vrcp.pop %v764
        %v850 = vmul.f32 %v764, %v849
        %v851 = vsub.f32 1.0, %v850
        %v852 = vmul.f32 %v849, %v851
        %v853 = vadd.f32 %v849, %v852
        %vm854 = vweird.f32 %v764
        %vm855 = vweird.f32 %v849
        %vm856 = vmor %vm854, %vm855
        %v857 = vsel %vm856, %v849, %v853
        %v858 = vand.u32 2147483647, %v764
        %vm859 = vcmp.eq.f32.partialorder %v858, 8.507059e+37
        %v860 = vand.u32 %v764, 2147483648
        %v861 = vor.u32 1.1754944e-38, %v860
        %v862 = vsel %vm859, %v861, %v857
        %v863 = vmul.f32 1.0, %v862
        %v864 = vrcp.pop %v772
        %v865 = vmul.f32 %v772, %v864
        %v866 = vsub.f32 1.0, %v865
        %v867 = vmul.f32 %v864, %v866
        %v868 = vadd.f32 %v864, %v867
        %vm869 = vweird.f32 %v772
        %vm870 = vweird.f32 %v864
        %vm871 = vmor %vm869, %vm870
        %v872 = vsel %vm871, %v864, %v868
        %v873 = vand.u32 2147483647, %v772
        %vm874 = vcmp.eq.f32.partialorder %v873, 8.507059e+37
        %v875 = vand.u32 %v772, 2147483648
        %v876 = vor.u32 1.1754944e-38, %v875
        %v877 = vsel %vm874, %v876, %v872
        %v878 = vmul.f32 1.0, %v877
        %v879 = vrcp.pop %v780
        %v880 = vmul.f32 %v780, %v879
        %v881 = vsub.f32 1.0, %v880
        %v882 = vmul.f32 %v879, %v881
        %v883 = vadd.f32 %v879, %v882
        %vm884 = vweird.f32 %v780
        %vm885 = vweird.f32 %v879
        %vm886 = vmor %vm884, %vm885
        %v887 = vsel %vm886, %v879, %v883
        %v888 = vand.u32 2147483647, %v780
        %vm889 = vcmp.eq.f32.partialorder %v888, 8.507059e+37
        %v890 = vand.u32 %v780, 2147483648
        %v891 = vor.u32 1.1754944e-38, %v890
        %v892 = vsel %vm889, %v891, %v887
        %v893 = vmul.f32 1.0, %v892
        %v894 = vrcp.pop %v788
        %v895 = vmul.f32 %v788, %v894
        %v896 = vsub.f32 1.0, %v895
        %v897 = vmul.f32 %v894, %v896
        %v898 = vadd.f32 %v894, %v897
        %vm899 = vweird.f32 %v788
        %vm900 = vweird.f32 %v894
        %vm901 = vmor %vm899, %vm900
        %v902 = vsel %vm901, %v894, %v898
        %v903 = vand.u32 2147483647, %v788
        %vm904 = vcmp.eq.f32.partialorder %v903, 8.507059e+37
        %v905 = vand.u32 %v788, 2147483648
        %v906 = vor.u32 1.1754944e-38, %v905
        %v907 = vsel %vm904, %v906, %v902
        %v908 = vmul.f32 1.0, %v907
        %v909 = vmul.f32 %v678, %v803
        %v910 = vmul.f32 %v680, %v818
        %v911 = vmul.f32 %v682, %v833
        %v912 = vmul.f32 %v684, %v848
        %v913 = vmul.f32 %v686, %v863
        %v914 = vmul.f32 %v688, %v878
        %v915 = vmul.f32 %v690, %v893
        %v916 = vmul.f32 %v692, %v908
        %v917 = vmul.f32 %v694, %v803
        %v918 = vmul.f32 %v696, %v818
        %v919 = vmul.f32 %v698, %v833
        %v920 = vmul.f32 %v700, %v848
        %v921 = vmul.f32 %v702, %v863
        %v922 = vmul.f32 %v704, %v878
        %v923 = vmul.f32 %v706, %v893
        %v924 = vmul.f32 %v708, %v908
        %v925 = vmul.f32 %v710, %v803
        %v926 = vmul.f32 %v712, %v818
        %v927 = vmul.f32 %v714, %v833
        %v928 = vmul.f32 %v716, %v848
        %v929 = vmul.f32 %v718, %v863
        %v930 = vmul.f32 %v720, %v878
        %v931 = vmul.f32 %v722, %v893
        %v932 = vmul.f32 %v724, %v908
        %v933 = vlog2.pop %v732
        %v934 = vmul.f32 %v933, 0.6931472
        %v935 = vlog2.pop %v740
        %v936 = vmul.f32 %v935, 0.6931472
        %v937 = vlog2.pop %v748
        %v938 = vmul.f32 %v937, 0.6931472
        %v939 = vlog2.pop %v756
        %v940 = vmul.f32 %v939, 0.6931472
        %v941 = vlog2.pop %v764
        %v942 = vmul.f32 %v941, 0.6931472
        %v943 = vlog2.pop %v772
        %v944 = vmul.f32 %v943, 0.6931472
        %v945 = vlog2.pop %v780
        %v946 = vmul.f32 %v945, 0.6931472
        %v947 = vlog2.pop %v788
        %v948 = vmul.f32 %v947, 0.6931472
        %v949 = vadd.f32 %v934, %v596
        %v950 = vadd.f32 %v936, %v604
        %v951 = vadd.f32 %v938, %v612
        %v952 = vadd.f32 %v940, %v620
        %v953 = vadd.f32 %v942, %v628
        %v954 = vadd.f32 %v944, %v636
        %v955 = vadd.f32 %v946, %v644
        %v956 = vadd.f32 %v948, %v652
        %v957 = vld [vmem:[%s368] sm:$0xff]
        %v958 = vld [vmem:[%s368 + $0x8] sm:$0xff]
        %v959 = vld [vmem:[%s368 + $0x10] sm:$0xff]
        %v960 = vmul.f32 %v909, %v565
        %v961 = vmul.f32 %v910, %v566
        %v962 = vmul.f32 %v911, %v567
        %v963 = vmul.f32 %v912, %v568
        %v964 = vmul.f32 %v913, %v569
        %v965 = vmul.f32 %v914, %v570
        %v966 = vmul.f32 %v915, %v571
        %v967 = vmul.f32 %v916, %v572
        %v968 = vmul.f32 %v917, %v573
        %v969 = vmul.f32 %v918, %v574
        %v970 = vmul.f32 %v919, %v575
        %v971 = vmul.f32 %v920, %v576
        %v972 = vmul.f32 %v921, %v577
        %v973 = vmul.f32 %v922, %v578
        %v974 = vmul.f32 %v923, %v579
        %v975 = vmul.f32 %v924, %v580
        %v976 = vmul.f32 %v925, %v581
        %v977 = vmul.f32 %v926, %v582
        %v978 = vmul.f32 %v927, %v583
        %v979 = vmul.f32 %v928, %v584
        %v980 = vmul.f32 %v929, %v585
        %v981 = vmul.f32 %v930, %v586
        %v982 = vmul.f32 %v931, %v587
        %v983 = vmul.f32 %v932, %v588
        %v984 = vadd.f32 %v960, %v961
        %v985 = vadd.f32 %v984, %v962
        %v986 = vadd.f32 %v985, %v963
        %v987 = vadd.f32 %v986, %v964
        %v988 = vadd.f32 %v987, %v965
        %v989 = vadd.f32 %v988, %v966
        %v990 = vadd.f32 %v989, %v967
        %991 = vadd.xlane.f32.xlu0 %v990
        %v992 = vpop.xlane.xlu0 %991
        %v993 = vadd.f32 %v968, %v969
        %v994 = vadd.f32 %v993, %v970
        %v995 = vadd.f32 %v994, %v971
        %v996 = vadd.f32 %v995, %v972
        %v997 = vadd.f32 %v996, %v973
        %v998 = vadd.f32 %v997, %v974
        %v999 = vadd.f32 %v998, %v975
        %1000 = vadd.xlane.f32.xlu0 %v999
        %v1001 = vpop.xlane.xlu0 %1000
        %v1002 = vadd.f32 %v976, %v977
        %v1003 = vadd.f32 %v1002, %v978
        %v1004 = vadd.f32 %v1003, %v979
        %v1005 = vadd.f32 %v1004, %v980
        %v1006 = vadd.f32 %v1005, %v981
        %v1007 = vadd.f32 %v1006, %v982
        %v1008 = vadd.f32 %v1007, %v983
        %1009 = vadd.xlane.f32.xlu0 %v1008
        %v1010 = vpop.xlane.xlu0 %1009
        %v1011 = vadd.f32 %v957, %v992
        %v1012 = vadd.f32 %v958, %v1001
        %v1013 = vadd.f32 %v959, %v1010
        %vm1014 = vcmask 7168
        %1015 = vst.msk [vmem:[%s368] sm:$0xff] %vm1014, %v1011
        %1016 = vst.msk [vmem:[%s368 + $0x8] sm:$0xff] %vm1014, %v1012
        %1017 = vst.msk [vmem:[%s368 + $0x10] sm:$0xff] %vm1014, %v1013
        %v1018 = vld [vmem:[%s373] sm:$0xff]
        %v1019 = vld [vmem:[%s373 + $0x8] sm:$0xff]
        %v1020 = vld [vmem:[%s373 + $0x10] sm:$0xff]
        %v1021 = vmul.f32 %v909, %v440
        %v1022 = vmul.f32 %v910, %v441
        %v1023 = vmul.f32 %v911, %v442
        %v1024 = vmul.f32 %v912, %v443
        %v1025 = vmul.f32 %v913, %v444
        %v1026 = vmul.f32 %v914, %v445
        %v1027 = vmul.f32 %v915, %v446
        %v1028 = vmul.f32 %v916, %v447
        %v1029 = vmul.f32 %v917, %v440
        %v1030 = vmul.f32 %v918, %v441
        %v1031 = vmul.f32 %v919, %v442
        %v1032 = vmul.f32 %v920, %v443
        %v1033 = vmul.f32 %v921, %v444
        %v1034 = vmul.f32 %v922, %v445
        %v1035 = vmul.f32 %v923, %v446
        %v1036 = vmul.f32 %v924, %v447
        %v1037 = vmul.f32 %v925, %v440
        %v1038 = vmul.f32 %v926, %v441
        %v1039 = vmul.f32 %v927, %v442
        %v1040 = vmul.f32 %v928, %v443
        %v1041 = vmul.f32 %v929, %v444
        %v1042 = vmul.f32 %v930, %v445
        %v1043 = vmul.f32 %v931, %v446
        %v1044 = vmul.f32 %v932, %v447
        %v1045 = vadd.f32 %v1021, %v1022
        %v1046 = vadd.f32 %v1045, %v1023
        %v1047 = vadd.f32 %v1046, %v1024
        %v1048 = vadd.f32 %v1047, %v1025
        %v1049 = vadd.f32 %v1048, %v1026
        %v1050 = vadd.f32 %v1049, %v1027
        %v1051 = vadd.f32 %v1050, %v1028
        %1052 = vadd.xlane.f32.xlu0 %v1051
        %v1053 = vpop.xlane.xlu0 %1052
        %v1054 = vadd.f32 %v1029, %v1030
        %v1055 = vadd.f32 %v1054, %v1031
        %v1056 = vadd.f32 %v1055, %v1032
        %v1057 = vadd.f32 %v1056, %v1033
        %v1058 = vadd.f32 %v1057, %v1034
        %v1059 = vadd.f32 %v1058, %v1035
        %v1060 = vadd.f32 %v1059, %v1036
        %1061 = vadd.xlane.f32.xlu0 %v1060
        %v1062 = vpop.xlane.xlu0 %1061
        %v1063 = vadd.f32 %v1037, %v1038
        %v1064 = vadd.f32 %v1063, %v1039
        %v1065 = vadd.f32 %v1064, %v1040
        %v1066 = vadd.f32 %v1065, %v1041
        %v1067 = vadd.f32 %v1066, %v1042
        %v1068 = vadd.f32 %v1067, %v1043
        %v1069 = vadd.f32 %v1068, %v1044
        %1070 = vadd.xlane.f32.xlu0 %v1069
        %v1071 = vpop.xlane.xlu0 %1070
        %v1072 = vadd.f32 %v1018, %v1053
        %v1073 = vadd.f32 %v1019, %v1062
        %v1074 = vadd.f32 %v1020, %v1071
        %1075 = vst.msk [vmem:[%s373] sm:$0xff] %vm1014, %v1072
        %1076 = vst.msk [vmem:[%s373 + $0x8] sm:$0xff] %vm1014, %v1073
        %1077 = vst.msk [vmem:[%s373 + $0x10] sm:$0xff] %vm1014, %v1074
        %v1078 = vld [vmem:[%s378] sm:$0xff]
        %v1079 = vld [vmem:[%s378 + $0x8] sm:$0xff]
        %v1080 = vld [vmem:[%s378 + $0x10] sm:$0xff]
        %v1081 = vadd.f32 %v565, %v566
        %v1082 = vadd.f32 %v1081, %v567
        %v1083 = vadd.f32 %v1082, %v568
        %v1084 = vadd.f32 %v1083, %v569
        %v1085 = vadd.f32 %v1084, %v570
        %v1086 = vadd.f32 %v1085, %v571
        %v1087 = vadd.f32 %v1086, %v572
        %1088 = vadd.xlane.f32.xlu0 %v1087
        %v1089 = vpop.xlane.xlu0 %1088
        %v1090 = vadd.f32 %v573, %v574
        %v1091 = vadd.f32 %v1090, %v575
        %v1092 = vadd.f32 %v1091, %v576
        %v1093 = vadd.f32 %v1092, %v577
        %v1094 = vadd.f32 %v1093, %v578
        %v1095 = vadd.f32 %v1094, %v579
        %v1096 = vadd.f32 %v1095, %v580
        %1097 = vadd.xlane.f32.xlu0 %v1096
        %v1098 = vpop.xlane.xlu0 %1097
        %v1099 = vadd.f32 %v581, %v582
        %v1100 = vadd.f32 %v1099, %v583
        %v1101 = vadd.f32 %v1100, %v584
        %v1102 = vadd.f32 %v1101, %v585
        %v1103 = vadd.f32 %v1102, %v586
        %v1104 = vadd.f32 %v1103, %v587
        %v1105 = vadd.f32 %v1104, %v588
        %1106 = vadd.xlane.f32.xlu0 %v1105
        %v1107 = vpop.xlane.xlu0 %1106
        %v1108 = vadd.f32 %v1078, %v1089
        %v1109 = vadd.f32 %v1079, %v1098
        %v1110 = vadd.f32 %v1080, %v1107
        %1111 = vst.msk [vmem:[%s378] sm:$0xff] %vm1014, %v1108
        %1112 = vst.msk [vmem:[%s378 + $0x8] sm:$0xff] %vm1014, %v1109
        %1113 = vst.msk [vmem:[%s378 + $0x10] sm:$0xff] %vm1014, %v1110
        %v1114 = vld [vmem:[%s383] sm:$0xff]
        %v1115 = vld [vmem:[%s383 + $0x8] sm:$0xff]
        %v1116 = vld [vmem:[%s383 + $0x10] sm:$0xff]
        %v1117 = vsub.f32 %v949, %v480
        %v1118 = vsub.f32 %v950, %v481
        %v1119 = vsub.f32 %v951, %v482
        %v1120 = vsub.f32 %v952, %v483
        %v1121 = vsub.f32 %v953, %v484
        %v1122 = vsub.f32 %v954, %v485
        %v1123 = vsub.f32 %v955, %v486
        %v1124 = vsub.f32 %v956, %v487
        %v1125 = vsub.f32 %v949, %v488
        %v1126 = vsub.f32 %v950, %v489
        %v1127 = vsub.f32 %v951, %v490
        %v1128 = vsub.f32 %v952, %v491
        %v1129 = vsub.f32 %v953, %v492
        %v1130 = vsub.f32 %v954, %v493
        %v1131 = vsub.f32 %v955, %v494
        %v1132 = vsub.f32 %v956, %v495
        %v1133 = vsub.f32 %v949, %v496
        %v1134 = vsub.f32 %v950, %v497
        %v1135 = vsub.f32 %v951, %v498
        %v1136 = vsub.f32 %v952, %v499
        %v1137 = vsub.f32 %v953, %v500
        %v1138 = vsub.f32 %v954, %v501
        %v1139 = vsub.f32 %v955, %v502
        %v1140 = vsub.f32 %v956, %v503
        %v1141 = vmul.f32 %v565, %v1117
        %v1142 = vmul.f32 %v566, %v1118
        %v1143 = vmul.f32 %v567, %v1119
        %v1144 = vmul.f32 %v568, %v1120
        %v1145 = vmul.f32 %v569, %v1121
        %v1146 = vmul.f32 %v570, %v1122
        %v1147 = vmul.f32 %v571, %v1123
        %v1148 = vmul.f32 %v572, %v1124
        %v1149 = vmul.f32 %v573, %v1125
        %v1150 = vmul.f32 %v574, %v1126
        %v1151 = vmul.f32 %v575, %v1127
        %v1152 = vmul.f32 %v576, %v1128
        %v1153 = vmul.f32 %v577, %v1129
        %v1154 = vmul.f32 %v578, %v1130
        %v1155 = vmul.f32 %v579, %v1131
        %v1156 = vmul.f32 %v580, %v1132
        %v1157 = vmul.f32 %v581, %v1133
        %v1158 = vmul.f32 %v582, %v1134
        %v1159 = vmul.f32 %v583, %v1135
        %v1160 = vmul.f32 %v584, %v1136
        %v1161 = vmul.f32 %v585, %v1137
        %v1162 = vmul.f32 %v586, %v1138
        %v1163 = vmul.f32 %v587, %v1139
        %v1164 = vmul.f32 %v588, %v1140
        %v1165 = vadd.f32 %v1141, %v1142
        %v1166 = vadd.f32 %v1165, %v1143
        %v1167 = vadd.f32 %v1166, %v1144
        %v1168 = vadd.f32 %v1167, %v1145
        %v1169 = vadd.f32 %v1168, %v1146
        %v1170 = vadd.f32 %v1169, %v1147
        %v1171 = vadd.f32 %v1170, %v1148
        %1172 = vadd.xlane.f32.xlu0 %v1171
        %v1173 = vpop.xlane.xlu0 %1172
        %v1174 = vadd.f32 %v1149, %v1150
        %v1175 = vadd.f32 %v1174, %v1151
        %v1176 = vadd.f32 %v1175, %v1152
        %v1177 = vadd.f32 %v1176, %v1153
        %v1178 = vadd.f32 %v1177, %v1154
        %v1179 = vadd.f32 %v1178, %v1155
        %v1180 = vadd.f32 %v1179, %v1156
        %1181 = vadd.xlane.f32.xlu0 %v1180
        %v1182 = vpop.xlane.xlu0 %1181
        %v1183 = vadd.f32 %v1157, %v1158
        %v1184 = vadd.f32 %v1183, %v1159
        %v1185 = vadd.f32 %v1184, %v1160
        %v1186 = vadd.f32 %v1185, %v1161
        %v1187 = vadd.f32 %v1186, %v1162
        %v1188 = vadd.f32 %v1187, %v1163
        %v1189 = vadd.f32 %v1188, %v1164
        %1190 = vadd.xlane.f32.xlu0 %v1189
        %v1191 = vpop.xlane.xlu0 %1190
        %v1192 = vadd.f32 %v1114, %v1173
        %v1193 = vadd.f32 %v1115, %v1182
        %v1194 = vadd.f32 %v1116, %v1191
        %1195 = vst.msk [vmem:[%s383] sm:$0xff] %vm1014, %v1192
        %1196 = vst.msk [vmem:[%s383 + $0x8] sm:$0xff] %vm1014, %v1193
        %1197 = vst.msk [vmem:[%s383 + $0x10] sm:$0xff] %vm1014, %v1194
        %p1198 = scmp.lt.s32.totalorder %s28, 1
        %s1199 = scalar_select %p1198, %s28, 1
        %s1200 = smul.addr %s1199, 3
        %s1201 = smul.addr %s1200, 8
        %s1202 = scalar_lea.vmem %s2, %s1201
        %p1203 = scmp.lt.s32.totalorder %s28, 1
        %s1204 = scalar_select %p1203, %s28, 1
        %s1205 = smul.addr %s1204, 3
        %s1206 = smul.addr %s1205, 8
        %s1207 = scalar_lea.vmem %s3, %s1206
        %p1208 = scmp.lt.s32.totalorder %s28, 1
        %s1209 = scalar_select %p1208, %s28, 1
        %s1210 = smul.addr %s1209, 3
        %s1211 = smul.addr %s1210, 8
        %s1212 = scalar_lea.vmem %s4, %s1211
        %p1213 = scmp.lt.s32.totalorder %s28, 1
        %s1214 = scalar_select %p1213, %s28, 1
        %s1215 = smul.addr %s1214, 3
        %s1216 = smul.addr %s1215, 8
        %s1217 = scalar_lea.vmem %s5, %s1216
        // Predicated region
        $region41: #{tpu_custom_call.1} parent=27 // pred_check
          %p1218 = pneg %p132
        $region42: #{tpu_custom_call.1} parent=27 // pred_check_branch
          %1220 = sbr.rel (%p1218) target = $region44
        $region43: #{tpu_custom_call.1} parent=27 // pred_region
          _
        $region44: #{tpu_custom_call.1} parent=27 // pred_fallthru
          _
        // Predicated region
        $region45: #{tpu_custom_call.1} parent=27 // pred_check
          %p1221 = pneg %p158
        $region46: #{tpu_custom_call.1} parent=27 // pred_check_branch
          %1223 = sbr.rel (%p1221) target = $region48
        $region47: #{tpu_custom_call.1} parent=27 // pred_region
          _
        $region48: #{tpu_custom_call.1} parent=27 // pred_fallthru
          _
        // Predicated region
        $region49: #{tpu_custom_call.1} parent=27 // pred_check
          %p1224 = pneg %p184
        $region50: #{tpu_custom_call.1} parent=27 // pred_check_branch
          %1226 = sbr.rel (%p1224) target = $region52
        $region51: #{tpu_custom_call.1} parent=27 // pred_region
          _
        $region52: #{tpu_custom_call.1} parent=27 // pred_fallthru
          _
        // Predicated region
        $region53: #{tpu_custom_call.1} parent=27 // pred_check
          %p1227 = pneg %p210
        $region54: #{tpu_custom_call.1} parent=27 // pred_check_branch
          %1229 = sbr.rel (%p1227) target = $region56
        $region55: #{tpu_custom_call.1} parent=27 // pred_region
          _
        $region56: #{tpu_custom_call.1} parent=27 // pred_fallthru
          _
      $region28: #{tpu_custom_call.1} parent=5 // pred_fallthru
        _
      %p1230 = scmp.le.s32.totalorder 2, %s18
      // Predicated region
      $region57: #{tpu_custom_call.1} parent=5 // pred_check
        %p1231 = pneg %p1230
      $region58: #{tpu_custom_call.1} parent=5 // pred_check_branch
        %1233 = sbr.rel (%p1231) target = $region60
      $region59: #{tpu_custom_call.1} parent=5 // pred_region
        %s1234 = ssub.s32 %s18, 2
        // Predicated region
        $region61: #{tpu_custom_call.1} parent=59 // pred_check
          %p1235 = pneg %p138
        $region62: #{tpu_custom_call.1} parent=59 // pred_check_branch
          %1237 = sbr.rel (%p1235) target = $region64
        $region63: #{tpu_custom_call.1} parent=59 // pred_region
          %p1238 = scmp.lt.s32.totalorder %s31, 1
          %s1239 = scalar_select %p1238, %s31, 1
          %s1240 = smul.addr %s1239, 3
          %s1241 = smul.addr %s1240, 8
          %s1242 = scalar_lea.vmem %s2, %s1241
        $region64: #{tpu_custom_call.1} parent=59 // pred_fallthru
          _
        // Predicated region
        $region65: #{tpu_custom_call.1} parent=59 // pred_check
          %p1243 = pneg %p164
        $region66: #{tpu_custom_call.1} parent=59 // pred_check_branch
          %1245 = sbr.rel (%p1243) target = $region68
        $region67: #{tpu_custom_call.1} parent=59 // pred_region
          %p1246 = scmp.lt.s32.totalorder %s31, 1
          %s1247 = scalar_select %p1246, %s31, 1
          %s1248 = smul.addr %s1247, 3
          %s1249 = smul.addr %s1248, 8
          %s1250 = scalar_lea.vmem %s3, %s1249
        $region68: #{tpu_custom_call.1} parent=59 // pred_fallthru
          _
        // Predicated region
        $region69: #{tpu_custom_call.1} parent=59 // pred_check
          %p1251 = pneg %p190
        $region70: #{tpu_custom_call.1} parent=59 // pred_check_branch
          %1253 = sbr.rel (%p1251) target = $region72
        $region71: #{tpu_custom_call.1} parent=59 // pred_region
          %p1254 = scmp.lt.s32.totalorder %s31, 1
          %s1255 = scalar_select %p1254, %s31, 1
          %s1256 = smul.addr %s1255, 3
          %s1257 = smul.addr %s1256, 8
          %s1258 = scalar_lea.vmem %s4, %s1257
        $region72: #{tpu_custom_call.1} parent=59 // pred_fallthru
          _
        // Predicated region
        $region73: #{tpu_custom_call.1} parent=59 // pred_check
          %p1259 = pneg %p216
        $region74: #{tpu_custom_call.1} parent=59 // pred_check_branch
          %1261 = sbr.rel (%p1259) target = $region76
        $region75: #{tpu_custom_call.1} parent=59 // pred_region
          %p1262 = scmp.lt.s32.totalorder %s31, 1
          %s1263 = scalar_select %p1262, %s31, 1
          %s1264 = smul.addr %s1263, 3
          %s1265 = smul.addr %s1264, 8
          %s1266 = scalar_lea.vmem %s5, %s1265
        $region76: #{tpu_custom_call.1} parent=59 // pred_fallthru
          _
      $region60: #{tpu_custom_call.1} parent=5 // pred_fallthru
        _
    $region6: #{tpu_custom_call.1} parent=1 // loop_footer
      %s22 = sadd.s32 1, %s18
    $region7: #{tpu_custom_call.1} parent=1 // loop_footer_branch
      %17 = sbr.rel target = $region3
    $region8: #{tpu_custom_call.1} parent=1 // loop_exit
      _
    %1267 = vsyncpa [#allocation3], 1
    %s1268 = scalar_lea.sflag [#allocation3], 1
    %1269 = vsyncpa %s1268, 1
    %1270 = vsyncpa [#allocation5], 1
    %s1271 = scalar_lea.sflag [#allocation5], 1
    %1272 = vsyncpa %s1271, 1

</llo_original>
